<compile_context>
chip_gen: v5e
topology: v5e:2x2
jax: 0.10.0
libtpu: 0.0.40
codegen_flags: <defaults>
</compile_context>

<pallas_src>
import functools

import numpy as np

import jax
import jax.numpy as jnp
from jax import lax
from jax.experimental import pallas as pl
from jax.experimental.pallas import tpu as pltpu


def _vmem_capacity_bytes():
    """Physical VMEM per TensorCore; conservative fallback if unavailable."""
    try:
        info = pltpu.get_tpu_info()
        cap = int(getattr(info, "vmem_capacity_bytes", 0) or 0)
        if cap > 0:
            return cap
    except Exception:
        pass
    return 64 << 20  # v7x-sized fallback: safe (just smaller tiles) everywhere


def _prefer_native_min(dtype):
    """Keep the channel-min in the input dtype (skip the pre-cast to f32)."""
    d = jnp.dtype(dtype)
    if d == jnp.dtype(jnp.float32):
        return True                       # no cast needed either way
    if d != jnp.dtype(jnp.bfloat16):
        return False                      # exotic dtypes: upcast first (safe)
    try:
        kind = jax.devices()[0].device_kind.lower()
    except Exception:
        return False
    # v5e and older have no bf16 VPU ops; cast to f32 before the min there.
    return not any(tag in kind for tag in ("v2", "v3", "v4", "v5"))


def _window_counts(n, p, win):
    """#windows (length win, stride 1, pad p) covering each original index."""
    idx = np.arange(n) + p
    n_win = n + 2 * p - win + 1
    cnt = np.minimum(idx, n_win - 1) - np.maximum(idx - win + 1, 0) + 1
    return np.maximum(cnt, 0).astype(np.float32)


def _dcp_kernel(x_ref, w_ref, out_ref, *, r_total, tile_r, ragged, native_min):
    # x_ref  : (BN, C, tile_r, L)  lane-dense spatial tile of BN batch elements
    # w_ref  : (tile_r, L)         f32 window-count weights for this row tile
    # out_ref: (1, 1)              this grid step's partial sum (f32)
    C = x_ref.shape[1]

    def chan(c):
        v = x_ref[:, c, :, :]                       # (BN, tile_r, L)
        return v if native_min else v.astype(jnp.float32)

    m = chan(0)
    for c in range(1, C):                           # C-1 elementwise VPU mins
        m = jnp.minimum(m, chan(c))
    a = jnp.abs(m).astype(jnp.float32)              # (BN, tile_r, L) f32
    contrib = a * w_ref[...]                        # weights broadcast over BN

    if ragged:
        # Last row tile reads past R; mask it (also guards stale/NaN rows).
        row = (lax.broadcasted_iota(jnp.int32, (tile_r, 1), 0)
               + pl.program_id(0) * tile_r)
        contrib = jnp.where(row < r_total, contrib, 0.0)

    out_ref[...] = jnp.zeros_like(out_ref) + jnp.sum(contrib)


def dcp_pallas(x, win_size=3, tile_r=None):
    N, C, H, W = x.shape
    p = win_size // 2
    itemsize = jnp.dtype(x.dtype).itemsize
    S = H * W

    # ---- lane-dense spatial layout: view (H, W) as (R, L), L % 128 == 0 ----
    if W % 128 == 0:
        L, R = W, H
    elif S % 128 == 0:
        L = 128
        for cand in (512, 256, 128):
            if S % cand == 0:
                L = cand
                break
        R = S // L
    else:
        L, R = W, H          # fallback: original layout (partial lanes)
    x_k = x.reshape(N, C, R, L)          # contiguous last dims -> free reshape

    # ---- separable window-count weights, flattened to the same layout ------
    wh = _window_counts(H, p, win_size)
    ww = _window_counts(W, p, win_size)
    w_map = jnp.asarray((wh[:, None] * ww[None, :]).reshape(R, L))

    # ---- generation-aware, byte-based tile sizing ---------------------------
    vmem_cap = _vmem_capacity_bytes()
    compute_budget = max(8 << 20, min(int(vmem_cap * 0.45), 56 << 20))
    # per-row footprint: double-buffered x + w streams plus ~5 f32 temps/elem
    bytes_per_r = L * (2 * C * itemsize + 2 * 4 + 5 * 4)
    if tile_r is None:
        tr = compute_budget // max(bytes_per_r, 1)
        tile_r = R if tr >= R else max(8, min((tr // 8) * 8, R))
        if N == 1 and R >= 16:
            # keep >=2 row tiles so both v7x TensorCores get work for N == 1
            half_r = max(8, (((R + 1) // 2) + 7) // 8 * 8)
            tile_r = min(tile_r, half_r)
    else:
        tile_r = min(int(tile_r), R)
    num_rt = -(-R // tile_r)
    ragged = (R % tile_r) != 0

    # ---- pack several small images per grid step (amortize step overhead) --
    BN = 1
    if num_rt == 1 and N > 1:
        per_image_bytes = C * R * L * itemsize
        max_bn = max(1, (4 << 20) // max(per_image_bytes, 1))
        for d in range(int(min(N, max_bn)), 0, -1):
            if N % d == 0:
                BN = d
                break
    num_nb = N // BN

    needed = (2 * BN * C * tile_r * L * itemsize      # x double buffer
              + 2 * tile_r * L * 4                    # weight double buffer
              + 5 * BN * tile_r * L * 4               # compute temporaries
              + (2 << 20))
    vmem_limit = int(min(int(vmem_cap * 0.9), max(2 * needed, 32 << 20)))

    kernel = functools.partial(
        _dcp_kernel, r_total=R, tile_r=tile_r, ragged=ragged,
        native_min=_prefer_native_min(x.dtype))

    cost = pl.CostEstimate(
        flops=int((C + 2) * N * S),
        transcendentals=0,
        bytes_accessed=int(N * C * S * itemsize + S * 4 + num_rt * num_nb * 4),
    )

    partials = pl.pallas_call(
        kernel,
        out_shape=jax.ShapeDtypeStruct((num_rt * num_nb, 1), jnp.float32),
        grid_spec=pltpu.PrefetchScalarGridSpec(
            num_scalar_prefetch=0,
            # Row-tile axis outermost: the weight block (indexed by rt only)
            # stays resident across the inner batch loop -> fetched ~once.
            grid=(num_rt, num_nb),
            in_specs=[
                pl.BlockSpec((BN, C, tile_r, L), lambda rt, nb: (nb, 0, rt, 0)),
                pl.BlockSpec((tile_r, L), lambda rt, nb: (rt, 0)),
            ],
            out_specs=pl.BlockSpec((1, 1), lambda rt, nb: (rt * num_nb + nb, 0)),
        ),
        compiler_params=pltpu.CompilerParams(
            dimension_semantics=("parallel", "parallel"),
            vmem_limit_bytes=vmem_limit,
        ),
        cost_estimate=cost,
    )(x_k, w_map)
    return jnp.sum(partials)


def dcp_ref(x, win_size=3):
    # Pure-JAX mirror of the PyTorch ops: pad -> unfold -> channel-min -> L1.
    p = win_size // 2
    N, C, H, W = x.shape
    xp = jnp.pad(x.astype(jnp.float32), ((0, 0), (0, 0), (p, p), (p, p)))
    a = jnp.abs(jnp.min(xp, axis=1))               # (N, H+2p, W+2p)
    Ho = H + 2 * p - win_size + 1
    Wo = W + 2 * p - win_size + 1
    total = jnp.float32(0.0)
    for i in range(win_size):
        for j in range(win_size):
            total = total + jnp.sum(a[:, i:i + Ho, j:j + Wo])
    return total


if __name__ == "__main__":
    key = jax.random.PRNGKey(0)
    k1, k2, k3, k4 = jax.random.split(key, 4)

    # 1) Small shape consistent with the module's forward; H*W folded into a
    #    lane-dense 256-wide layout, both batch elements packed in one step.
    x1 = jax.random.normal(k1, (2, 4, 16, 16), dtype=jnp.float32)
    o1 = jax.block_until_ready(dcp_pallas(x1, win_size=3))
    r1 = dcp_ref(x1, win_size=3)
    assert jnp.allclose(o1, r1, rtol=1e-5, atol=1e-2), (o1, r1)

    # 2) W already lane-aligned; forced small tile -> multi-tile + ragged mask.
    x2 = jax.random.normal(k2, (2, 3, 24, 128), dtype=jnp.float32)
    o2 = jax.block_until_ready(dcp_pallas(x2, win_size=3, tile_r=16))
    r2 = dcp_ref(x2, win_size=3)
    assert jnp.allclose(o2, r2, rtol=1e-5, atol=1e-2), (o2, r2)

    # 3) Neither W nor H*W a multiple of 128 -> fallback (unflattened) layout,
    #    plus the N==1 two-row-tile split and ragged masking.
    x3 = jax.random.normal(k3, (1, 3, 18, 20), dtype=jnp.float32)
    o3 = jax.block_until_ready(dcp_pallas(x3, win_size=3))
    r3 = dcp_ref(x3, win_size=3)
    assert jnp.allclose(o3, r3, rtol=1e-5, atol=1e-2), (o3, r3)

    # 4) bf16 input: channel-min stays bf16 on v6e/v7x, cast-first elsewhere.
    x4 = jax.random.normal(k4, (2, 4, 32, 64), dtype=jnp.bfloat16)
    o4 = jax.block_until_ready(dcp_pallas(x4, win_size=3))
    r4 = dcp_ref(x4, win_size=3)
    assert jnp.allclose(o4, r4, rtol=1e-3, atol=1e-1), (o4, r4)

    print("KERNEL_OK")
</pallas_src>

<mosaic_0001>
module attributes {stable_mosaic.version = 11 : i64} {
  func.func @_dcp_kernel(%arg0: i32, %arg1: i32, %arg2: memref<2x4x1x256xf32, #tpu.memory_space<vmem>>, %arg3: memref<1x256xf32, #tpu.memory_space<vmem>>, %arg4: memref<1x1xf32, #tpu.memory_space<vmem>>) attributes {dimension_semantics = [#tpu.dimension_semantics<parallel>, #tpu.dimension_semantics<parallel>], iteration_bounds = array<i64: 1, 1>, scalar_prefetch = 0 : i64, scratch_operands = 0 : i64, tpu.core_type = #tpu.core_type<tc>, window_params = [{transform_indices = @transform_0, window_bounds = array<i64: 2, 4, 1, 256>}, {transform_indices = @transform_1, window_bounds = array<i64: 1, 256>}, {transform_indices = @transform_2, window_bounds = array<i64: 1, 1>}]} {
    %c0 = arith.constant 0 : index
    %c0_0 = arith.constant 0 : index
    %c0_1 = arith.constant 0 : index
    %c0_2 = arith.constant 0 : index
    %0 = vector.load %arg2[%c0, %c0_0, %c0_1, %c0_2] : memref<2x4x1x256xf32, #tpu.memory_space<vmem>>, vector<2x1x1x256xf32>
    %1 = vector.shape_cast %0 : vector<2x1x1x256xf32> to vector<2x1x256xf32>
    %c0_3 = arith.constant 0 : index
    %c1 = arith.constant 1 : index
    %c0_4 = arith.constant 0 : index
    %c0_5 = arith.constant 0 : index
    %2 = vector.load %arg2[%c0_3, %c1, %c0_4, %c0_5] : memref<2x4x1x256xf32, #tpu.memory_space<vmem>>, vector<2x1x1x256xf32>
    %3 = vector.shape_cast %2 : vector<2x1x1x256xf32> to vector<2x1x256xf32>
    %4 = arith.minimumf %1, %3 : vector<2x1x256xf32>
    %c0_6 = arith.constant 0 : index
    %c2 = arith.constant 2 : index
    %c0_7 = arith.constant 0 : index
    %c0_8 = arith.constant 0 : index
    %5 = vector.load %arg2[%c0_6, %c2, %c0_7, %c0_8] : memref<2x4x1x256xf32, #tpu.memory_space<vmem>>, vector<2x1x1x256xf32>
    %6 = vector.shape_cast %5 : vector<2x1x1x256xf32> to vector<2x1x256xf32>
    %7 = arith.minimumf %4, %6 : vector<2x1x256xf32>
    %c0_9 = arith.constant 0 : index
    %c3 = arith.constant 3 : index
    %c0_10 = arith.constant 0 : index
    %c0_11 = arith.constant 0 : index
    %8 = vector.load %arg2[%c0_9, %c3, %c0_10, %c0_11] : memref<2x4x1x256xf32, #tpu.memory_space<vmem>>, vector<2x1x1x256xf32>
    %9 = vector.shape_cast %8 : vector<2x1x1x256xf32> to vector<2x1x256xf32>
    %10 = arith.minimumf %7, %9 : vector<2x1x256xf32>
    %11 = math.absf %10 : vector<2x1x256xf32>
    %c0_12 = arith.constant 0 : index
    %c0_13 = arith.constant 0 : index
    %12 = vector.load %arg3[%c0_12, %c0_13] : memref<1x256xf32, #tpu.memory_space<vmem>>, vector<1x256xf32>
    %13 = vector.shape_cast %12 : vector<1x256xf32> to vector<1x1x256xf32>
    %14 = vector.broadcast %13 : vector<1x1x256xf32> to vector<2x1x256xf32>
    %15 = arith.mulf %11, %14 : vector<2x1x256xf32>
    %cst = arith.constant 0.000000e+00 : f32
    %16 = vector.broadcast %cst : f32 to vector<1x1xf32>
    %17 = vector.shape_cast %15 : vector<2x1x256xf32> to vector<1x2x1x256xf32>
    %cst_14 = arith.constant dense<0.000000e+00> : vector<1xf32>
    %18 = vector.multi_reduction <add>, %17, %cst_14 [1, 2, 3] : vector<1x2x1x256xf32> to vector<1xf32>
    %19 = vector.shape_cast %18 : vector<1xf32> to vector<1x1x1x1xf32>
    %20 = vector.extract %19[0, 0, 0, 0] : f32 from vector<1x1x1x1xf32>
    %21 = vector.broadcast %20 : f32 to vector<1x1xf32>
    %22 = arith.addf %16, %21 : vector<1x1xf32>
    %c0_15 = arith.constant 0 : index
    %c0_16 = arith.constant 0 : index
    %23 = vector.load %arg4[%c0_15, %c0_16] : memref<1x1xf32, #tpu.memory_space<vmem>>, vector<1x1xf32>
    tpu.vector_store %arg4[%c0_15, %c0_16], %22 {strides = array<i32>} : memref<1x1xf32, #tpu.memory_space<vmem>>, vector<1x1xf32>,
    return
  }
  func.func @transform_0(%arg0: i32, %arg1: i32) -> (i32, i32, i32, i32) {
    %c0_i32 = arith.constant 0 : i32
    %c0_i32_0 = arith.constant 0 : i32
    %c0_i32_1 = arith.constant 0 : i32
    return %arg1, %c0_i32, %arg0, %c0_i32_0 : i32, i32, i32, i32
  }
  func.func @transform_1(%arg0: i32, %arg1: i32) -> (i32, i32) {
    %c0_i32 = arith.constant 0 : i32
    %c0_i32_0 = arith.constant 0 : i32
    return %arg0, %c0_i32 : i32, i32
  }
  func.func @transform_2(%arg0: i32, %arg1: i32) -> (i32, i32) {
    %c1_i32 = arith.constant 1 : i32
    %0 = arith.muli %arg0, %c1_i32 : i32
    %1 = arith.addi %0, %arg1 : i32
    %c0_i32 = arith.constant 0 : i32
    %c0_i32_0 = arith.constant 0 : i32
    return %1, %c0_i32 : i32, i32
  }
}

</mosaic_0001>

<llo_original>
// kernel: tpu_custom_call.1
$region0: #{tpu_custom_call.1}
  #allocation0 [shape = 'u32[]', space=smem, size = 0x4, offset = 0x4, fixed_abs, tag = 'smem constant byte address 0x4 - core index']
  #allocation1 [shape = 'u32[72,128]{1,0:T(1,128)}', space=vmem, size = 0x9000, scoped, tag = 'internal scratch']
  %s0 = inlined_call_operand.hbm [shape: f32[2,4,1,256], index: 0, kind: input, shape index: {}]
  %s1 = inlined_call_operand.hbm [shape: f32[1,256], index: 1, kind: input, shape index: {}]
  %s2 = inlined_call_operand.hbm [shape: f32[1,1], index: 2, kind: output, shape index: {}]
  %s3 = sld [smem:[#allocation0]]
  $region26: #{tpu_custom_call.1} parent=0
    _
  %s5 = ssub.s32 1, %s3
  %s6 = scalar_select 0, %s5, %s3
  $region1: #{tpu_custom_call.1} parent=0
    #allocation2 [shape = 'u8[8192]{0}', space=vmem, size = 0x2000, scoped, tag = 'input window, operand 0, single buffered']
    #allocation3 [shape = 's32[1]{0}', space=sflag, size = 0x4, scoped, tag = 'scoped memory for tpu_custom_call.1']
    #allocation4 [shape = 's32[1]{0}', space=sflag, size = 0x4, scoped, tag = 'scoped memory for tpu_custom_call.1']
    #allocation5 [shape = 'u8[1024]{0}', space=vmem, size = 0x400, scoped, tag = 'input window, operand 1, single buffered']
    #allocation6 [shape = 's32[1]{0}', space=sflag, size = 0x4, scoped, tag = 'scoped memory for tpu_custom_call.1']
    #allocation7 [shape = 'u8[512]{0}', space=vmem, size = 0x400, scoped, tag = 'output window, operand 0, single buffered']
    %7 = vsyncpa [#allocation3], 0
    %8 = vsyncpa [#allocation6], 0
    %9 = vsyncpa [#allocation4], 0
    // Predicated region
    $region2: #{tpu_custom_call.1} parent=1 // pred_check
      _
    $region3: #{tpu_custom_call.1} parent=1 // pred_check_branch
      %11 = sbr.rel (0) target = $region5
    $region4: #{tpu_custom_call.1} parent=1 // pred_region
      %13 = vsyncadd [#allocation3], 0
      %s14 = sshll.u32 %s0, 4
      %s15 = int_to_ptr.hbm [resolvable:$true] %s14
      %s16 = sshll.u32 [#allocation2], 4
      %s17 = int_to_ptr.vmem [resolvable:$true] %s16
      %22 = dma.hbm_to_vmem [thread:$0]  %s15, 256, %s17, [#allocation3], 32, 32, 2
    $region5: #{tpu_custom_call.1} parent=1 // pred_fallthru
      _
    // Predicated region
    $region6: #{tpu_custom_call.1} parent=1 // pred_check
      _
    $region7: #{tpu_custom_call.1} parent=1 // pred_check_branch
      %24 = sbr.rel (0) target = $region9
    $region8: #{tpu_custom_call.1} parent=1 // pred_region
      %26 = vsyncadd [#allocation6], 0
      %s28 = sshll.u32 %s1, 4
      %s29 = int_to_ptr.hbm [resolvable:$true] %s28
      %s30 = sshll.u32 [#allocation5], 4
      %s31 = int_to_ptr.vmem [resolvable:$true] %s30
      %33 = dma.hbm_to_vmem [thread:$0]  %s29, 32, %s31, [#allocation6]
    $region9: #{tpu_custom_call.1} parent=1 // pred_fallthru
      _
    // Predicated region
    $region10: #{tpu_custom_call.1} parent=1 // pred_check
      _
    $region11: #{tpu_custom_call.1} parent=1 // pred_check_branch
      %35 = sbr.rel (0) target = $region13
    $region12: #{tpu_custom_call.1} parent=1 // pred_region
      %37 = dma.done [#allocation3], 256
    $region13: #{tpu_custom_call.1} parent=1 // pred_fallthru
      _
    // Predicated region
    $region14: #{tpu_custom_call.1} parent=1 // pred_check
      _
    $region15: #{tpu_custom_call.1} parent=1 // pred_check_branch
      %39 = sbr.rel (0) target = $region17
    $region16: #{tpu_custom_call.1} parent=1 // pred_region
      %41 = dma.done [#allocation6], 32
    $region17: #{tpu_custom_call.1} parent=1 // pred_fallthru
      _
    %s42 = sadd.s32 0, 0
    %v43 = vld [vmem:[#allocation2] sm:$0x3]
    %v44 = vld [vmem:[#allocation2 + $0x8] sm:$0x3]
    %s45 = scalar_lea.vmem [#allocation2], 2
    %v46 = vld [vmem:[%s45] sm:$0x3]
    %v47 = vld [vmem:[%s45 + $0x8] sm:$0x3]
    %v48 = vmin.f32 %v43, %v46
    %v49 = vmin.f32 %v44, %v47
    %s50 = scalar_lea.vmem [#allocation2], 4
    %v51 = vld [vmem:[%s50] sm:$0x3]
    %v52 = vld [vmem:[%s50 + $0x8] sm:$0x3]
    %v53 = vmin.f32 %v48, %v51
    %v54 = vmin.f32 %v49, %v52
    %s55 = scalar_lea.vmem [#allocation2], 6
    %v56 = vld [vmem:[%s55] sm:$0x3]
    %v57 = vld [vmem:[%s55 + $0x8] sm:$0x3]
    %v58 = vmin.f32 %v53, %v56
    %v59 = vmin.f32 %v54, %v57
    %v60 = vand.u32 2147483647, %v58
    %v61 = vand.u32 2147483647, %v59
    %v62 = vld [vmem:[#allocation5] sm:$0x3]
    %v63 = vmul.f32 %v60, %v62
    %v64 = vmul.f32 %v61, %v62
    %v67 = vperm.slane %v63, 0
    %v68 = vperm.slane %v63, 1
    %v69 = vperm.slane %v64, 0
    %v70 = vperm.slane %v64, 1
    %vm75 = vcmask 1040384
    %v76 = vsel %vm75, %v67, 0.0
    %v77 = vsel %vm75, %v68, 0.0
    %v78 = vadd.f32 %v76, %v77
    %v79 = vsel %vm75, %v69, 0.0
    %v80 = vadd.f32 %v78, %v79
    %v81 = vsel %vm75, %v70, 0.0
    %v82 = vadd.f32 %v80, %v81
    %83 = vadd.xlane.f32.xlu0 %v82
    %v84 = vpop.xlane.xlu0 %83
    %v85 = vrot.slane %v84, 4
    %v86 = vadd.f32 %v84, %v85
    %v87 = vrot.slane %v86, 2
    %v88 = vadd.f32 %v86, %v87
    %v89 = vrot.slane %v88, 1
    %v90 = vadd.f32 %v88, %v89
    %s91 = vtos %v90
    %v92 = vstv %s91
    %v93 = vadd.f32 %v92, 0.0
    %vm94 = vcmask 0
    %95 = vst.msk [vmem:[#allocation7] sm:$0x1] %vm94, %v93
    // Predicated region
    $region18: #{tpu_custom_call.1} parent=1 // pred_check
      _
    $region19: #{tpu_custom_call.1} parent=1 // pred_check_branch
      %97 = sbr.rel (0) target = $region21
    $region20: #{tpu_custom_call.1} parent=1 // pred_region
      %s98 = sadd.s32 0, 0
      %100 = vsyncadd [#allocation4], 0
      %s101 = scalar_lea.hbm %s2, %s98
      %s103 = sshll.u32 [#allocation7], 4
      %s104 = int_to_ptr.vmem [resolvable:$true] %s103
      %s105 = sshll.u32 %s101, 4
      %s106 = int_to_ptr.hbm [resolvable:$true] %s105
      %108 = dma.vmem_to_hbm [thread:$0]  %s104, 16, %s106, [#allocation4]
    $region21: #{tpu_custom_call.1} parent=1 // pred_fallthru
      _
    // Predicated region
    $region22: #{tpu_custom_call.1} parent=1 // pred_check
      _
    $region23: #{tpu_custom_call.1} parent=1 // pred_check_branch
      %110 = sbr.rel (0) target = $region25
    $region24: #{tpu_custom_call.1} parent=1 // pred_region
      %112 = dma.done [#allocation4], 16
    $region25: #{tpu_custom_call.1} parent=1 // pred_fallthru
      _
    %113 = vsyncpa [#allocation3], 1
    %114 = vsyncpa [#allocation6], 1
    %115 = vsyncpa [#allocation4], 1

</llo_original>
